<compile_context>
chip_gen: v7x
topology: tpu7x:2x2x1
jax: 0.10.0
libtpu: 0.0.40
codegen_flags: <defaults>
</compile_context>

<pallas_src>
import math
from functools import partial

import jax
import jax.numpy as jnp
from jax.experimental import pallas as pl
from jax.experimental.pallas import tpu as pltpu


def _round_up(v, m):
    return -(-v // m) * m


def _proj_kernel(w_ref, x_ref, o_ref):
    # w_ref : (2,) f32 in SMEM       (w[0] multiplies x[..., 0], w[1] x[..., 1])
    # x_ref : (2, block_rows, lanes) lane-dense VMEM tile (leading dim = pair)
    # o_ref : (block_rows, lanes)    lane-dense VMEM tile
    cdt = x_ref.dtype
    w0 = w_ref[0].astype(cdt)
    w1 = w_ref[1].astype(cdt)
    o_ref[...] = (w0 * x_ref[0] + w1 * x_ref[1]).astype(o_ref.dtype)


@partial(jax.jit, static_argnames=("max_lanes", "max_block_rows"))
def prado_projection_operator(x, weight, *, max_lanes=2048, max_block_rows=512):
    """x: (..., 2), weight: (1, 2).  Returns (..., 1) = Linear(x) w/o bias."""
    in_features = weight.shape[-1]
    assert in_features == 2 and x.shape[-1] == in_features
    lead = x.shape[:-1]
    M = math.prod(lead)
    dtype = x.dtype

    # ---- slab geometry (all static Python math) -----------------------------
    # lanes: large multiple of 128 for unmasked stores, but shrunk for tiny M
    # so padding stays modest.
    lanes = min(max_lanes, _round_up(max(128, -(-M // 8)), 128))
    rows = -(-M // lanes)
    # >= 2 blocks whenever there is more than one vreg-row of work, so the
    # "parallel" grid axis can shard across v7x's two TensorCores.
    n_blocks = 1 if rows <= 8 else max(2, -(-rows // max_block_rows))
    block_rows = _round_up(-(-rows // n_blocks), 8)
    rows_pad = n_blocks * block_rows
    pad = rows_pad * lanes - M

    # ---- single wrapper relayout pass ---------------------------------------
    x2 = x.reshape(M, in_features)          # free reshape
    xt = x2.T                               # (2, M): the one HBM relayout pass
    if pad:                                 # ragged shapes only
        xt = jnp.pad(xt, ((0, 0), (0, pad)))
    x_slab = xt.reshape(in_features, rows_pad, lanes)   # free reshape

    # ---- VMEM budget: double-buffered (input, output) blocks + headroom -----
    in_bytes = in_features * block_rows * lanes * x_slab.dtype.itemsize
    out_bytes = block_rows * lanes * jnp.dtype(dtype).itemsize
    vmem_limit = min(max(2 * (in_bytes + out_bytes) + (2 << 20), 8 << 20), 56 << 20)

    out = pl.pallas_call(
        _proj_kernel,
        out_shape=jax.ShapeDtypeStruct((rows_pad, lanes), dtype),
        grid=(n_blocks,),
        in_specs=[
            pl.BlockSpec(memory_space=pltpu.MemorySpace.SMEM),            # (2,) weight
            pl.BlockSpec((in_features, block_rows, lanes), lambda i: (0, i, 0)),
        ],
        out_specs=pl.BlockSpec((block_rows, lanes), lambda i: (i, 0)),
        compiler_params=pltpu.CompilerParams(
            dimension_semantics=("parallel",),
            vmem_limit_bytes=vmem_limit,
        ),
    )(weight.reshape(in_features).astype(jnp.float32), x_slab)

    # Aligned case: pure free reshape, no extra output pass.
    y = out.reshape(-1)
    if pad:
        y = y[:M]
    return y.reshape(*lead, 1)


if __name__ == "__main__":
    key = jax.random.PRNGKey(0)

    # Deterministic parameter init exactly as in the module's __init__.
    weight = jnp.array([[-1.0, 1.0]], dtype=jnp.float32)  # (out=1, in=2)

    # (batch=2, seq=8, features=32, pair=2): small shape, exercises the padded
    # single-block path.
    x = jax.random.normal(key, (2, 8, 32, 2), dtype=jnp.float32)
    y = jax.block_until_ready(prado_projection_operator(x, weight))
    ref = x[..., 1:2] - x[..., 0:1]
    assert y.shape == (2, 8, 32, 1), y.shape
    assert y.dtype == jnp.float32
    assert jnp.allclose(y, ref, atol=1e-6), float(jnp.max(jnp.abs(y - ref)))

    # Aligned shape with a multi-step grid (exercises the no-pad / no-slice
    # fast path and the >=2-block megacore sharding).
    x_big = jax.random.normal(jax.random.PRNGKey(1), (4, 64, 128, 2), dtype=jnp.float32)
    y_big = jax.block_until_ready(prado_projection_operator(x_big, weight))
    ref_big = x_big[..., 1:2] - x_big[..., 0:1]
    assert y_big.shape == (4, 64, 128, 1), y_big.shape
    assert jnp.allclose(y_big, ref_big, atol=1e-6)

    # Ragged leading shape (exercises the padded-tail path).
    x_odd = jax.random.normal(jax.random.PRNGKey(2), (3, 7, 5, 2), dtype=jnp.float32)
    y_odd = jax.block_until_ready(prado_projection_operator(x_odd, weight))
    ref_odd = x_odd[..., 1:2] - x_odd[..., 0:1]
    assert y_odd.shape == (3, 7, 5, 1), y_odd.shape
    assert jnp.allclose(y_odd, ref_odd, atol=1e-6)

    print("KERNEL_OK")
</pallas_src>

<mosaic_0001>
module attributes {stable_mosaic.version = 11 : i64} {
  func.func @_proj_kernel(%arg0: i32, %arg1: memref<2xf32, #tpu.memory_space<smem>>, %arg2: memref<2x8x128xf32, #tpu.memory_space<vmem>>, %arg3: memref<8x128xf32, #tpu.memory_space<vmem>>) attributes {dimension_semantics = [#tpu.dimension_semantics<parallel>], iteration_bounds = array<i64: 1>, scalar_prefetch = 0 : i64, scratch_operands = 0 : i64, tpu.core_type = #tpu.core_type<tc>, window_params = [{transform_indices = @transform_0, window_bounds = array<i64: 2>}, {transform_indices = @transform_1, window_bounds = array<i64: 2, 8, 128>}, {transform_indices = @transform_2, window_bounds = array<i64: 8, 128>}]} {
    %c0 = arith.constant 0 : index
    %0 = memref.load %arg1[%c0] : memref<2xf32, #tpu.memory_space<smem>>
    %c1 = arith.constant 1 : index
    %1 = memref.load %arg1[%c1] : memref<2xf32, #tpu.memory_space<smem>>
    %c0_0 = arith.constant 0 : index
    %c0_1 = arith.constant 0 : index
    %c0_2 = arith.constant 0 : index
    %2 = vector.load %arg2[%c0_0, %c0_1, %c0_2] : memref<2x8x128xf32, #tpu.memory_space<vmem>>, vector<1x8x128xf32>
    %3 = vector.shape_cast %2 : vector<1x8x128xf32> to vector<8x128xf32>
    %4 = vector.broadcast %0 : f32 to vector<8x128xf32>
    %5 = arith.mulf %4, %3 : vector<8x128xf32>
    %c1_3 = arith.constant 1 : index
    %c0_4 = arith.constant 0 : index
    %c0_5 = arith.constant 0 : index
    %6 = vector.load %arg2[%c1_3, %c0_4, %c0_5] : memref<2x8x128xf32, #tpu.memory_space<vmem>>, vector<1x8x128xf32>
    %7 = vector.shape_cast %6 : vector<1x8x128xf32> to vector<8x128xf32>
    %8 = vector.broadcast %1 : f32 to vector<8x128xf32>
    %9 = arith.mulf %8, %7 : vector<8x128xf32>
    %10 = arith.addf %5, %9 : vector<8x128xf32>
    %c0_6 = arith.constant 0 : index
    %c0_7 = arith.constant 0 : index
    %11 = vector.load %arg3[%c0_6, %c0_7] : memref<8x128xf32, #tpu.memory_space<vmem>>, vector<8x128xf32>
    tpu.vector_store %arg3[%c0_6, %c0_7], %10 {strides = array<i32>} : memref<8x128xf32, #tpu.memory_space<vmem>>, vector<8x128xf32>,
    return
  }
  func.func @transform_0(%arg0: i32) -> i32 {
    %c0_i32 = arith.constant 0 : i32
    %c0_i32_0 = arith.constant 0 : i32
    return %c0_i32 : i32
  }
  func.func @transform_1(%arg0: i32) -> (i32, i32, i32) {
    %c0_i32 = arith.constant 0 : i32
    %c0_i32_0 = arith.constant 0 : i32
    %c0_i32_1 = arith.constant 0 : i32
    return %c0_i32, %arg0, %c0_i32_0 : i32, i32, i32
  }
  func.func @transform_2(%arg0: i32) -> (i32, i32) {
    %c0_i32 = arith.constant 0 : i32
    %c0_i32_0 = arith.constant 0 : i32
    return %arg0, %c0_i32 : i32, i32
  }
}

</mosaic_0001>

<llo_original>
// kernel: prado_projection_operator.1
$region0: #{prado_projection_operator.1}
  #allocation0 [shape = 'u32[]', space=smem, size = 0x4, offset = 0x4, fixed_abs, tag = 'smem constant byte address 0x4 - core index']
  #allocation1 [shape = 'u32[144,128]{1,0:T(1,128)}', space=vmem, size = 0x12000, scoped, tag = 'internal scratch']
  %s0 = inlined_call_operand.vmem [shape: f32[2], index: 0, kind: input, shape index: {}]
  %s1 = inlined_call_operand.vmem [shape: f32[2,8,128], index: 1, kind: input, shape index: {}]
  %s2 = inlined_call_operand.vmem [shape: f32[8,128], index: 2, kind: output, shape index: {}]
  %s3 = sld [smem:[#allocation0]]
  $region22: #{prado_projection_operator.1} parent=0
    _
  %s5 = ssub.s32 1, %s3
  %s6 = scalar_select 0, %s5, %s3
  $region1: #{prado_projection_operator.1} parent=0
    #allocation2 [shape = 'u8[512]{0}', space=smem, size = 0x200, scoped, tag = 'input window, operand 0, single buffered']
    #allocation3 [shape = 's32[1]{0}', space=sflag, size = 0x4, scoped, tag = 'scoped memory for prado_projection_operator.1']
    %7 = vsyncpa [#allocation3], 0
    // Predicated region
    $region2: #{prado_projection_operator.1} parent=1 // pred_check
      _
    $region3: #{prado_projection_operator.1} parent=1 // pred_check_branch
      %9 = sbr.rel (0) target = $region5
    $region4: #{prado_projection_operator.1} parent=1 // pred_region
      %s11 = ssub.s32 16, 16
      %12 = vsyncadd [#allocation3], %s11
      %s14 = sshll.u32 %s0, 4
      %s15 = int_to_ptr.vmem [resolvable:$true] %s14
      %17 = dma.vmem_to_smem %s15, 16, [#allocation2], [#allocation3]
    $region5: #{prado_projection_operator.1} parent=1 // pred_fallthru
      _
    // Predicated region
    $region6: #{prado_projection_operator.1} parent=1 // pred_check
      _
    $region7: #{prado_projection_operator.1} parent=1 // pred_check_branch
      %19 = sbr.rel (0) target = $region9
    $region8: #{prado_projection_operator.1} parent=1 // pred_region
      _
    $region9: #{prado_projection_operator.1} parent=1 // pred_fallthru
      _
    // Predicated region
    $region10: #{prado_projection_operator.1} parent=1 // pred_check
      _
    $region11: #{prado_projection_operator.1} parent=1 // pred_check_branch
      %21 = sbr.rel (0) target = $region13
    $region12: #{prado_projection_operator.1} parent=1 // pred_region
      %22 = dma.done [#allocation3], 16
    $region13: #{prado_projection_operator.1} parent=1 // pred_fallthru
      _
    %23 = sfence
    %s24 = sld [smem:[#allocation2]]
    %s25 = sld [smem:[#allocation2 + $0x1]]
    %v26 = vld [vmem:[%s1] sm:$0xff]
    %v27 = vstv %s24
    %v28 = vmul.f32 %v27, %v26
    %s29 = scalar_lea.vmem %s1, 8
    %v30 = vld [vmem:[%s29] sm:$0xff]
    %v31 = vstv %s25
    %v32 = vmul.f32 %v31, %v30
    %v33 = vadd.f32 %v28, %v32
    %34 = vst [vmem:[%s2] sm:$0xff] %v33
    // Predicated region
    $region14: #{prado_projection_operator.1} parent=1 // pred_check
      _
    $region15: #{prado_projection_operator.1} parent=1 // pred_check_branch
      %36 = sbr.rel (0) target = $region17
    $region16: #{prado_projection_operator.1} parent=1 // pred_region
      _
    $region17: #{prado_projection_operator.1} parent=1 // pred_fallthru
      _
    // Predicated region
    $region18: #{prado_projection_operator.1} parent=1 // pred_check
      _
    $region19: #{prado_projection_operator.1} parent=1 // pred_check_branch
      %38 = sbr.rel (0) target = $region21
    $region20: #{prado_projection_operator.1} parent=1 // pred_region
      _
    $region21: #{prado_projection_operator.1} parent=1 // pred_fallthru
      _
    %39 = vsyncpa [#allocation3], 1

</llo_original>
